<compile_context>
chip_gen: v5e
topology: v5e:2x2
jax: 0.10.0
libtpu: 0.0.40
codegen_flags: <defaults>
</compile_context>

<pallas_src>
import numpy as np
import jax
import jax.numpy as jnp
from jax.experimental import pallas as pl
from jax.experimental.pallas import tpu as pltpu

_PI = float(np.pi)


def _atan2(y, x):
    """Elementwise atan2 from mul/add/div/select (Cephes atanf polynomial).

    Max error ~1e-6 rad.  Handles atan2(0, 0) -> 0 like numpy.
    """
    abs_y = jnp.abs(y)
    abs_x = jnp.abs(x)
    mx = jnp.maximum(abs_x, abs_y)
    mn = jnp.minimum(abs_x, abs_y)
    t = mn / jnp.maximum(mx, jnp.float32(1e-30))          # t in [0, 1]
    # atan(t) on [0, 1]: range-reduce at tan(pi/8), then Cephes polynomial.
    hi = t > jnp.float32(0.4142135623730950)
    z_in = jnp.where(hi, (t - 1.0) / (t + 1.0), t)
    base = jnp.where(hi, jnp.float32(_PI / 4), jnp.float32(0.0))
    z2 = z_in * z_in
    poly = ((jnp.float32(8.05374449538e-2) * z2 - jnp.float32(1.38776856032e-1)) * z2
            + jnp.float32(1.99777106478e-1)) * z2 - jnp.float32(3.33329491539e-1)
    a = base + z_in + z_in * z2 * poly                     # atan(min/max)
    a = jnp.where(abs_y > abs_x, jnp.float32(_PI / 2) - a, a)
    a = jnp.where(x < 0.0, jnp.float32(_PI) - a, a)
    return jnp.where(y < 0.0, -a, a)


def _stft_kernel(frames_ref, w_ref, mag_ref, phase_ref):
    """frames_ref: (1, TILE_F, N); w_ref: (2*CUT_P, N);
    mag_ref / phase_ref: (1, CUT_P, TILE_F)."""
    x = frames_ref[0]                                      # (TILE_F, N)
    w = w_ref[...]                                         # (2*CUT_P, N)
    # One fused MXU matmul: contract the filter-tap axis of both operands.
    acc = jax.lax.dot_general(
        w, x,
        dimension_numbers=(((1,), (1,)), ((), ())),
        preferred_element_type=jnp.float32,
    )                                                      # (2*CUT_P, TILE_F)
    cp = w_ref.shape[0] // 2                               # static, multiple of 8
    re = acc[:cp, :]
    im = acc[cp:, :]
    mag_ref[0] = jnp.sqrt(re * re + im * im)
    phase_ref[0] = _atan2(im, re)


def make_forward_basis(filter_length):
    """Same construction as the PyTorch module's __init__ (deterministic)."""
    fourier_basis = np.fft.fft(np.eye(filter_length))
    cutoff = int(filter_length / 2 + 1)
    fourier_basis = np.vstack(
        [np.real(fourier_basis[:cutoff, :]), np.imag(fourier_basis[:cutoff, :])]
    )
    return jnp.asarray(fourier_basis, dtype=jnp.float32)   # (2*cutoff, filter_length)


def stft_transform(input_data, forward_basis, filter_length, hop_length):
    """Equivalent of STFT.transform(input_data) -> (magnitude, phase)."""
    B, T = input_data.shape
    N = filter_length
    cutoff = N // 2 + 1

    x = input_data.astype(jnp.float32)
    padded = jnp.pad(x, ((0, 0), (N, N)))                  # conv padding=N
    Tp = padded.shape[1]
    n_frames = (Tp - N) // hop_length + 1

    # ---- framing (slice-based when hop divides N; gather fallback otherwise) ----
    if N % hop_length == 0:
        r = N // hop_length
        need = (n_frames + r - 1) * hop_length
        if need > Tp:
            padded = jnp.pad(padded, ((0, 0), (0, need - Tp)))
        chunks = padded[:, :need].reshape(B, n_frames + r - 1, hop_length)
        frames = jnp.concatenate(
            [chunks[:, i:i + n_frames, :] for i in range(r)], axis=-1
        )                                                  # (B, n_frames, N)
    else:
        starts = jnp.arange(n_frames) * hop_length
        idx = starts[:, None] + jnp.arange(N)[None, :]
        frames = padded[:, idx]                            # (B, n_frames, N)

    # ---- tiling: pad frame axis to a multiple of TILE_F (>=128, lane-dense) ----
    TILE_F = 256 if n_frames >= 256 else 128
    n_frames_pad = ((n_frames + TILE_F - 1) // TILE_F) * TILE_F
    if n_frames_pad != n_frames:
        frames = jnp.pad(frames, ((0, 0), (0, n_frames_pad - n_frames), (0, 0)))

    # ---- fused, row-padded weight: [real basis ; imag basis] ----
    CUT_P = ((cutoff + 7) // 8) * 8                        # sublane-aligned
    wre = forward_basis[:cutoff, :]
    wim = forward_basis[cutoff:, :]
    w2 = jnp.zeros((2 * CUT_P, N), jnp.float32)
    w2 = w2.at[:cutoff, :].set(wre).at[CUT_P:CUT_P + cutoff, :].set(wim)

    grid = (B, n_frames_pad // TILE_F)
    mag_p, phase_p = pl.pallas_call(
        _stft_kernel,
        grid=grid,
        in_specs=[
            pl.BlockSpec((1, TILE_F, N), lambda b, j: (b, j, 0)),
            pl.BlockSpec((2 * CUT_P, N), lambda b, j: (0, 0)),   # VMEM-resident
        ],
        out_specs=[
            pl.BlockSpec((1, CUT_P, TILE_F), lambda b, j: (b, 0, j)),
            pl.BlockSpec((1, CUT_P, TILE_F), lambda b, j: (b, 0, j)),
        ],
        out_shape=[
            jax.ShapeDtypeStruct((B, CUT_P, n_frames_pad), jnp.float32),
            jax.ShapeDtypeStruct((B, CUT_P, n_frames_pad), jnp.float32),
        ],
        compiler_params=pltpu.CompilerParams(
            dimension_semantics=("parallel", "parallel"),
            vmem_limit_bytes=48 * 1024 * 1024,             # headroom below v7x 64 MiB
        ),
        cost_estimate=pl.CostEstimate(
            flops=int(2 * B * n_frames_pad * N * 2 * CUT_P),
            transcendentals=int(2 * B * n_frames_pad * CUT_P),
            bytes_accessed=int(4 * (B * n_frames_pad * N + 2 * CUT_P * N
                                    + 2 * B * CUT_P * n_frames_pad)),
        ),
    )(frames, w2)

    # Drop padded rows/frames; result is already in (B, cutoff, n_frames) layout.
    magnitude = mag_p[:, :cutoff, :n_frames]
    phase = phase_p[:, :cutoff, :n_frames]
    return magnitude, phase


def _reference_transform(input_data, forward_basis, filter_length, hop_length):
    """Pure-JAX reference mirroring F.conv1d(..., stride=hop, padding=N)."""
    N = filter_length
    cutoff = N // 2 + 1
    out = jax.lax.conv_general_dilated(
        input_data[:, None, :].astype(jnp.float32),
        forward_basis[:, None, :],
        window_strides=(hop_length,),
        padding=[(N, N)],
        dimension_numbers=("NCH", "OIH", "NCH"),
        precision=jax.lax.Precision.HIGHEST,
    )
    re = out[:, :cutoff, :]
    im = out[:, cutoff:, :]
    return jnp.sqrt(re * re + im * im), jnp.arctan2(im, re)


if __name__ == "__main__":
    # Small, consistent shapes: batch=2, num_samples=256, filter_length=64, hop=32.
    filter_length = 64
    hop_length = 32
    B, T = 2, 256

    key = jax.random.PRNGKey(0)
    input_data = jax.random.normal(key, (B, T), dtype=jnp.float32)

    forward_basis = make_forward_basis(filter_length)

    magnitude, phase = stft_transform(input_data, forward_basis, filter_length, hop_length)
    magnitude = jax.block_until_ready(magnitude)
    phase = jax.block_until_ready(phase)

    # Validate against the pure-JAX conv reference.
    ref_mag, ref_phase = _reference_transform(
        input_data, forward_basis, filter_length, hop_length
    )
    cutoff = filter_length // 2 + 1
    n_frames = (T + filter_length) // hop_length + 1
    assert magnitude.shape == ref_mag.shape == (B, cutoff, n_frames)
    assert phase.shape == ref_phase.shape == (B, cutoff, n_frames)

    np.testing.assert_allclose(np.asarray(magnitude), np.asarray(ref_mag),
                               rtol=2e-4, atol=2e-3)

    # Phase: compare modulo 2*pi (atan2 branch cut at +/-pi) on bins with
    # non-negligible energy (phase is mathematically ill-defined as mag -> 0).
    mag_np = np.asarray(ref_mag)
    dphi = np.abs(np.mod(np.asarray(phase) - np.asarray(ref_phase) + np.pi,
                         2.0 * np.pi) - np.pi)
    mask = mag_np > 1e-1
    max_dphi = float(dphi[mask].max())
    assert max_dphi < 5e-3, f"phase mismatch: {max_dphi}"

    print("KERNEL_OK")
</pallas_src>

<mosaic_0001>
module attributes {stable_mosaic.version = 11 : i64} {
  func.func @_stft_kernel(%arg0: i32, %arg1: i32, %arg2: memref<1x128x64xf32, #tpu.memory_space<vmem>>, %arg3: memref<80x64xf32, #tpu.memory_space<vmem>>, %arg4: memref<1x40x128xf32, #tpu.memory_space<vmem>>, %arg5: memref<1x40x128xf32, #tpu.memory_space<vmem>>) attributes {dimension_semantics = [#tpu.dimension_semantics<parallel>, #tpu.dimension_semantics<parallel>], iteration_bounds = array<i64: 2, 1>, scalar_prefetch = 0 : i64, scratch_operands = 0 : i64, tpu.core_type = #tpu.core_type<tc>, window_params = [{transform_indices = @transform_0, window_bounds = array<i64: 1, 128, 64>}, {pipeline_mode = #tpu.pipeline_mode<synchronous>, transform_indices = @transform_1, window_bounds = array<i64: 80, 64>}, {transform_indices = @transform_2, window_bounds = array<i64: 1, 40, 128>}, {transform_indices = @transform_3, window_bounds = array<i64: 1, 40, 128>}]} {
    %c0 = arith.constant 0 : index
    %c0_0 = arith.constant 0 : index
    %c0_1 = arith.constant 0 : index
    %0 = vector.load %arg2[%c0, %c0_0, %c0_1] : memref<1x128x64xf32, #tpu.memory_space<vmem>>, vector<1x128x64xf32>
    %1 = vector.shape_cast %0 : vector<1x128x64xf32> to vector<128x64xf32>
    %c0_2 = arith.constant 0 : index
    %c0_3 = arith.constant 0 : index
    %2 = vector.load %arg3[%c0_2, %c0_3] : memref<80x64xf32, #tpu.memory_space<vmem>>, vector<80x64xf32>
    %cst = arith.constant dense<0.000000e+00> : vector<80x128xf32>
    %3 = tpu.matmul %2, %1, %cst {dimension_numbers = #tpu.dot_dimension_numbers<[1], [1], [0], [0], [0, 0, 1, 0], [], []>} : vector<80x64xf32>, vector<128x64xf32>, vector<80x128xf32> -> vector<80x128xf32>
    %4 = vector.extract_strided_slice %3 {offsets = [0, 0], sizes = [40, 128], strides = [1, 1]} : vector<80x128xf32> to vector<40x128xf32>
    %5 = vector.extract_strided_slice %3 {offsets = [40, 0], sizes = [40, 128], strides = [1, 1]} : vector<80x128xf32> to vector<40x128xf32>
    %6 = arith.mulf %4, %4 : vector<40x128xf32>
    %7 = arith.mulf %5, %5 : vector<40x128xf32>
    %8 = arith.addf %6, %7 : vector<40x128xf32>
    %9 = math.sqrt %8 : vector<40x128xf32>
    %c0_4 = arith.constant 0 : index
    %c0_5 = arith.constant 0 : index
    %c0_6 = arith.constant 0 : index
    %10 = vector.load %arg4[%c0_4, %c0_5, %c0_6] : memref<1x40x128xf32, #tpu.memory_space<vmem>>, vector<1x40x128xf32>
    %11 = vector.shape_cast %10 : vector<1x40x128xf32> to vector<40x128xf32>
    %12 = vector.shape_cast %9 : vector<40x128xf32> to vector<1x40x128xf32>
    tpu.vector_store %arg4[%c0_4, %c0_5, %c0_6], %12 {strides = array<i32>} : memref<1x40x128xf32, #tpu.memory_space<vmem>>, vector<1x40x128xf32>,
    %13 = math.absf %5 : vector<40x128xf32>
    %14 = math.absf %4 : vector<40x128xf32>
    %15 = arith.maximumf %14, %13 : vector<40x128xf32>
    %16 = arith.minimumf %14, %13 : vector<40x128xf32>
    %cst_7 = arith.constant 1.000000e-30 : f32
    %17 = vector.broadcast %cst_7 : f32 to vector<40x128xf32>
    %18 = arith.maximumf %15, %17 : vector<40x128xf32>
    %19 = arith.divf %16, %18 : vector<40x128xf32>
    %cst_8 = arith.constant 0.414213568 : f32
    %20 = vector.broadcast %cst_8 : f32 to vector<40x128xf32>
    %21 = arith.cmpf ogt, %19, %20 : vector<40x128xf32>
    %cst_9 = arith.constant 1.000000e+00 : f32
    %22 = vector.broadcast %cst_9 : f32 to vector<40x128xf32>
    %23 = arith.subf %19, %22 : vector<40x128xf32>
    %cst_10 = arith.constant 1.000000e+00 : f32
    %24 = vector.broadcast %cst_10 : f32 to vector<40x128xf32>
    %25 = arith.addf %19, %24 : vector<40x128xf32>
    %26 = arith.divf %23, %25 : vector<40x128xf32>
    %27 = arith.select %21, %26, %19 : vector<40x128xi1>, vector<40x128xf32>
    %cst_11 = arith.constant 0.785398185 : f32
    %cst_12 = arith.constant 0.000000e+00 : f32
    %28 = vector.broadcast %cst_11 : f32 to vector<40x128xf32>
    %29 = vector.broadcast %cst_12 : f32 to vector<40x128xf32>
    %30 = arith.select %21, %28, %29 : vector<40x128xi1>, vector<40x128xf32>
    %31 = arith.mulf %27, %27 : vector<40x128xf32>
    %cst_13 = arith.constant 0.0805374458 : f32
    %32 = vector.broadcast %cst_13 : f32 to vector<40x128xf32>
    %33 = arith.mulf %32, %31 : vector<40x128xf32>
    %cst_14 = arith.constant 0.138776854 : f32
    %34 = vector.broadcast %cst_14 : f32 to vector<40x128xf32>
    %35 = arith.subf %33, %34 : vector<40x128xf32>
    %36 = arith.mulf %35, %31 : vector<40x128xf32>
    %cst_15 = arith.constant 0.199777111 : f32
    %37 = vector.broadcast %cst_15 : f32 to vector<40x128xf32>
    %38 = arith.addf %36, %37 : vector<40x128xf32>
    %39 = arith.mulf %38, %31 : vector<40x128xf32>
    %cst_16 = arith.constant 0.333329499 : f32
    %40 = vector.broadcast %cst_16 : f32 to vector<40x128xf32>
    %41 = arith.subf %39, %40 : vector<40x128xf32>
    %42 = arith.addf %30, %27 : vector<40x128xf32>
    %43 = arith.mulf %27, %31 : vector<40x128xf32>
    %44 = arith.mulf %43, %41 : vector<40x128xf32>
    %45 = arith.addf %42, %44 : vector<40x128xf32>
    %46 = arith.cmpf ogt, %13, %14 : vector<40x128xf32>
    %cst_17 = arith.constant 1.57079637 : f32
    %47 = vector.broadcast %cst_17 : f32 to vector<40x128xf32>
    %48 = arith.subf %47, %45 : vector<40x128xf32>
    %49 = arith.select %46, %48, %45 : vector<40x128xi1>, vector<40x128xf32>
    %cst_18 = arith.constant 0.000000e+00 : f32
    %50 = vector.broadcast %cst_18 : f32 to vector<40x128xf32>
    %51 = arith.cmpf olt, %4, %50 : vector<40x128xf32>
    %cst_19 = arith.constant 3.14159274 : f32
    %52 = vector.broadcast %cst_19 : f32 to vector<40x128xf32>
    %53 = arith.subf %52, %49 : vector<40x128xf32>
    %54 = arith.select %51, %53, %49 : vector<40x128xi1>, vector<40x128xf32>
    %cst_20 = arith.constant 0.000000e+00 : f32
    %55 = vector.broadcast %cst_20 : f32 to vector<40x128xf32>
    %56 = arith.cmpf olt, %5, %55 : vector<40x128xf32>
    %cst_21 = arith.constant 0.000000e+00 : f32
    %57 = vector.broadcast %cst_21 : f32 to vector<40x128xf32>
    %58 = arith.subf %57, %54 : vector<40x128xf32>
    %59 = arith.select %56, %58, %54 : vector<40x128xi1>, vector<40x128xf32>
    %c0_22 = arith.constant 0 : index
    %c0_23 = arith.constant 0 : index
    %c0_24 = arith.constant 0 : index
    %60 = vector.load %arg5[%c0_22, %c0_23, %c0_24] : memref<1x40x128xf32, #tpu.memory_space<vmem>>, vector<1x40x128xf32>
    %61 = vector.shape_cast %60 : vector<1x40x128xf32> to vector<40x128xf32>
    %62 = vector.shape_cast %59 : vector<40x128xf32> to vector<1x40x128xf32>
    tpu.vector_store %arg5[%c0_22, %c0_23, %c0_24], %62 {strides = array<i32>} : memref<1x40x128xf32, #tpu.memory_space<vmem>>, vector<1x40x128xf32>,
    return
  }
  func.func @transform_0(%arg0: i32, %arg1: i32) -> (i32, i32, i32) {
    %c0_i32 = arith.constant 0 : i32
    %c0_i32_0 = arith.constant 0 : i32
    return %arg0, %arg1, %c0_i32 : i32, i32, i32
  }
  func.func @transform_1(%arg0: i32, %arg1: i32) -> (i32, i32) {
    %c0_i32 = arith.constant 0 : i32
    %c0_i32_0 = arith.constant 0 : i32
    %c0_i32_1 = arith.constant 0 : i32
    return %c0_i32, %c0_i32_0 : i32, i32
  }
  func.func @transform_2(%arg0: i32, %arg1: i32) -> (i32, i32, i32) {
    %c0_i32 = arith.constant 0 : i32
    %c0_i32_0 = arith.constant 0 : i32
    return %arg0, %c0_i32, %arg1 : i32, i32, i32
  }
  func.func @transform_3(%arg0: i32, %arg1: i32) -> (i32, i32, i32) {
    %c0_i32 = arith.constant 0 : i32
    %c0_i32_0 = arith.constant 0 : i32
    return %arg0, %c0_i32, %arg1 : i32, i32, i32
  }
}

</mosaic_0001>

<llo_original>
// kernel: tpu_custom_call.1
$region0: #{tpu_custom_call.1}
  #allocation0 [shape = 'u32[]', space=smem, size = 0x4, offset = 0x4, fixed_abs, tag = 'smem constant byte address 0x4 - core index']
  #allocation1 [shape = 'u32[72,128]{1,0:T(1,128)}', space=vmem, size = 0x9000, scoped, tag = 'internal scratch']
  %s0 = inlined_call_operand.vmem [shape: f32[2,128,64], index: 0, kind: input, shape index: {}]
  %s1 = inlined_call_operand.vmem [shape: f32[80,64], index: 1, kind: input, shape index: {}]
  %s2 = inlined_call_operand.hbm [shape: f32[2,40,128], index: 2, kind: output, shape index: {0}]
  %s3 = inlined_call_operand.hbm [shape: f32[2,40,128], index: 3, kind: output, shape index: {1}]
  %4 = xla_tuple %s2, %s3
  %s5 = sld [smem:[#allocation0]]
  $region49: #{tpu_custom_call.1} parent=0
    _
  %s7 = ssub.s32 1, %s5
  %s8 = scalar_select 0, %s7, %s5
  $region1: #{tpu_custom_call.1} parent=0
    #allocation2 [shape = 'u8[40960]{0}', space=vmem, size = 0xa000, scoped, tag = 'output window, operand 0']
    #allocation3 [shape = 's32[2]{0}', space=sflag, size = 0x8, scoped, tag = 'scoped memory for tpu_custom_call.1']
    #allocation4 [shape = 'u8[40960]{0}', space=vmem, size = 0xa000, scoped, tag = 'output window, operand 1']
    #allocation5 [shape = 's32[2]{0}', space=sflag, size = 0x8, scoped, tag = 'scoped memory for tpu_custom_call.1']
    %9 = vsyncpa [#allocation3], 0
    %s10 = scalar_lea.sflag [#allocation3], 1
    %11 = vsyncpa %s10, 0
    %12 = vsyncpa [#allocation5], 0
    %s13 = scalar_lea.sflag [#allocation5], 1
    %14 = vsyncpa %s13, 0
    loop: start=0, step=1, limit=4
    $region2: #{tpu_custom_call.1} parent=1 // loop_pre_header
      _
    $region3: #{tpu_custom_call.1} parent=1 // loop_header
      %s16 = sphi 0, %s20
      %p17 = scmp.ge.s32.totalorder %s16, 4
      %s23 = sphi 0, %s35
      %s24 = sphi 0, %s31
      %s25 = sphi 0, %s23
      %s26 = sphi 0, %s24
      %s27 = sphi 0, %s25
      %s28 = sphi 0, %s26
      %s40 = sphi 0, %s42
      %s43 = sphi 0, %s40
      %s44 = sphi 0, %s43
      %s60 = sphi 0, %s44
      %s64 = sphi 0, %s64
      %s66 = sphi 0, %s64
      %s67 = sphi 0, %s66
      %s81 = sphi 0, %s67
      %s89 = sphi 0, %s91
      %s92 = sphi 0, %s89
      %s93 = sphi 0, %s92
      %s109 = sphi 0, %s93
      %s117 = sphi 0, %s119
      %s120 = sphi 0, %s117
      %s121 = sphi 0, %s120
      %s137 = sphi 0, %s121
    $region4: #{tpu_custom_call.1} parent=1 // loop_header_branch
      %19 = sbr.rel (%p17) target = $region8
    $region5: #{tpu_custom_call.1} parent=1 // loop_body
      %s21 = ssub.s32 %s16, 1
      %s22 = ssub.s32 %s16, 2
      %s29 = sadd.s32 1, %s24
      %p30 = scmp.ge.s32.totalorder %s29, 1
      %s31 = scalar_select %p30, 0, %s29
      %s32 = sadd.s32 1, %s23
      %s33 = scalar_select %p30, %s32, %s23
      %p34 = scmp.ge.s32.totalorder %s33, 2
      %s35 = scalar_select %p34, 0, %s33
      %s36 = ssub.s32 %s23, %s35
      %s37 = ssub.s32 %s24, %s31
      %s38 = sor.u32 %s36, %s37
      %p39 = scmp.eq.s32.totalorder %s38, 0
      %s41 = sadd.s32 %s40, 1
      %s42 = scalar_select %p39, %s40, %s41
      %p45 = pneg %p39
      %p46 = scmp.eq.s32.totalorder %s16, 1
      %p47 = por %p45, %p46
      %p48 = scmp.ne.s32.totalorder %s40, %s43
      %p49 = scmp.eq.s32.totalorder %s16, 0
      %p50 = por %p48, %p49
      %p51 = scmp.ne.s32.totalorder %s40, %s43
      %p52 = scmp.eq.s32.totalorder %s21, 1
      %p53 = por %p51, %p52
      %p54 = scmp.ne.s32.totalorder %s43, %s44
      %p55 = scmp.eq.s32.totalorder %s21, 0
      %p56 = por %p54, %p55
      %p57 = scmp.ne.s32.totalorder %s43, %s44
      %p58 = scmp.eq.s32.totalorder %s22, 1
      %p59 = por %p57, %p58
      %p61 = scmp.ne.s32.totalorder %s44, %s60
      %p62 = scmp.eq.s32.totalorder %s22, 0
      %p63 = por %p61, %p62
      %s65 = sadd.s32 %s64, 1
      %p68 = scmp.eq.s32.totalorder %s16, 1
      %p69 = scmp.ne.s32.totalorder %s64, %s66
      %p70 = scmp.eq.s32.totalorder %s16, 0
      %p71 = por %p69, %p70
      %p72 = scmp.ne.s32.totalorder %s64, %s66
      %p73 = scmp.eq.s32.totalorder %s21, 1
      %p74 = por %p72, %p73
      %p75 = scmp.ne.s32.totalorder %s66, %s67
      %p76 = scmp.eq.s32.totalorder %s21, 0
      %p77 = por %p75, %p76
      %p78 = scmp.ne.s32.totalorder %s66, %s67
      %p79 = scmp.eq.s32.totalorder %s22, 1
      %p80 = por %p78, %p79
      %p82 = scmp.ne.s32.totalorder %s67, %s81
      %p83 = scmp.eq.s32.totalorder %s22, 0
      %p84 = por %p82, %p83
      %s85 = ssub.s32 %s23, %s35
      %s86 = ssub.s32 %s24, %s31
      %s87 = sor.u32 %s85, %s86
      %p88 = scmp.eq.s32.totalorder %s87, 0
      %s90 = sadd.s32 %s89, 1
      %s91 = scalar_select %p88, %s89, %s90
      %p94 = pneg %p88
      %p95 = scmp.eq.s32.totalorder %s16, 1
      %p96 = por %p94, %p95
      %p97 = scmp.ne.s32.totalorder %s89, %s92
      %p98 = scmp.eq.s32.totalorder %s16, 0
      %p99 = por %p97, %p98
      %p100 = scmp.ne.s32.totalorder %s89, %s92
      %p101 = scmp.eq.s32.totalorder %s21, 1
      %p102 = por %p100, %p101
      %p103 = scmp.ne.s32.totalorder %s92, %s93
      %p104 = scmp.eq.s32.totalorder %s21, 0
      %p105 = por %p103, %p104
      %p106 = scmp.ne.s32.totalorder %s92, %s93
      %p107 = scmp.eq.s32.totalorder %s22, 1
      %p108 = por %p106, %p107
      %p110 = scmp.ne.s32.totalorder %s93, %s109
      %p111 = scmp.eq.s32.totalorder %s22, 0
      %p112 = por %p110, %p111
      %s113 = ssub.s32 %s23, %s35
      %s114 = ssub.s32 %s24, %s31
      %s115 = sor.u32 %s113, %s114
      %p116 = scmp.eq.s32.totalorder %s115, 0
      %s118 = sadd.s32 %s117, 1
      %s119 = scalar_select %p116, %s117, %s118
      %p122 = pneg %p116
      %p123 = scmp.eq.s32.totalorder %s16, 1
      %p124 = por %p122, %p123
      %p125 = scmp.ne.s32.totalorder %s117, %s120
      %p126 = scmp.eq.s32.totalorder %s16, 0
      %p127 = por %p125, %p126
      %p128 = scmp.ne.s32.totalorder %s117, %s120
      %p129 = scmp.eq.s32.totalorder %s21, 1
      %p130 = por %p128, %p129
      %p131 = scmp.ne.s32.totalorder %s120, %s121
      %p132 = scmp.eq.s32.totalorder %s21, 0
      %p133 = por %p131, %p132
      %p134 = scmp.ne.s32.totalorder %s120, %s121
      %p135 = scmp.eq.s32.totalorder %s22, 1
      %p136 = por %p134, %p135
      %p138 = scmp.ne.s32.totalorder %s121, %s137
      %p139 = scmp.eq.s32.totalorder %s22, 0
      %p140 = por %p138, %p139
      %p141 = scmp.le.s32.totalorder 1, %s16
      %p142 = scmp.lt.s32.totalorder %s16, 3
      %p143 = pnand %p141, %p142
      %p144 = pneg %p143
      // Predicated region
      $region9: #{tpu_custom_call.1} parent=5 // pred_check
        _
      $region10: #{tpu_custom_call.1} parent=5 // pred_check_branch
        %146 = sbr.rel (%p143) target = $region12
      $region11: #{tpu_custom_call.1} parent=5 // pred_region
        %s147 = ssub.s32 %s16, 1
        // Predicated region
        $region13: #{tpu_custom_call.1} parent=11 // pred_check
          %p148 = pneg %p77
        $region14: #{tpu_custom_call.1} parent=11 // pred_check_branch
          %150 = sbr.rel (%p148) target = $region16
        $region15: #{tpu_custom_call.1} parent=11 // pred_region
          _
        $region16: #{tpu_custom_call.1} parent=11 // pred_fallthru
          _
      $region12: #{tpu_custom_call.1} parent=5 // pred_fallthru
        _
      %p151 = scmp.lt.s32.totalorder %s16, 2
      // Predicated region
      $region17: #{tpu_custom_call.1} parent=5 // pred_check
        %p152 = pneg %p151
      $region18: #{tpu_custom_call.1} parent=5 // pred_check_branch
        %154 = sbr.rel (%p152) target = $region20
      $region19: #{tpu_custom_call.1} parent=5 // pred_region
        // Predicated region
        $region21: #{tpu_custom_call.1} parent=19 // pred_check
          %p155 = pneg %p50
        $region22: #{tpu_custom_call.1} parent=19 // pred_check_branch
          %157 = sbr.rel (%p155) target = $region24
        $region23: #{tpu_custom_call.1} parent=19 // pred_region
          %s158 = smul.u32 16, %s24
          %p159 = scmp.lt.s32.totalorder %s23, 1
          %s160 = scalar_select %p159, %s23, 1
          %p161 = scmp.lt.s32.totalorder %s158, 15
          %s162 = scalar_select %p161, %s158, 15
          %s163 = smul.addr %s160, 16
          %s164 = sadd.s32 %s162, %s163
          %s165 = smul.addr %s164, 8
          %s166 = scalar_lea.vmem %s0, %s165
          %s167 = smul.u32 16, %s24
        $region24: #{tpu_custom_call.1} parent=19 // pred_fallthru
          _
      $region20: #{tpu_custom_call.1} parent=5 // pred_fallthru
        _
      %p168 = scmp.le.s32.totalorder 1, %s16
      %p169 = scmp.lt.s32.totalorder %s16, 3
      %p170 = pnand %p168, %p169
      %p171 = pneg %p170
      // Predicated region
      $region25: #{tpu_custom_call.1} parent=5 // pred_check
        _
      $region26: #{tpu_custom_call.1} parent=5 // pred_check_branch
        %173 = sbr.rel (%p170) target = $region28
      $region27: #{tpu_custom_call.1} parent=5 // pred_region
        %s174 = ssub.s32 %s16, 1
        %s175 = smul.u32 16, %s26
        %p176 = scmp.lt.s32.totalorder %s25, 1
        %s177 = scalar_select %p176, %s25, 1
        %p178 = scmp.lt.s32.totalorder %s175, 15
        %s179 = scalar_select %p178, %s175, 15
        %s180 = smul.addr %s177, 16
        %s181 = sadd.s32 %s179, %s180
        %s182 = smul.addr %s181, 8
        %s183 = scalar_lea.vmem %s0, %s182
        %p184 = pneg %p56
        %p185 = pneg %p53
        %p186 = pneg %p77
        %p187 = pneg %p74
        %p188 = pneg %p105
        %p189 = pneg %p102
        %s190 = sand.u32 %s92, 1
        %s191 = scalar_lea.sflag [#allocation3], %s190
        %s192 = sand.u32 %s92, 1
        %s193 = smul.addr %s192, 40
        %s194 = scalar_lea.vmem [#allocation2], %s193
        %p195 = pneg %p133
        %p196 = pneg %p130
        %s197 = sand.u32 %s120, 1
        %s198 = scalar_lea.sflag [#allocation5], %s197
        %s199 = sand.u32 %s120, 1
        %s200 = smul.addr %s199, 40
        %s201 = scalar_lea.vmem [#allocation4], %s200
        %s202 = smul.u32 16, %s26
        %p203 = scmp.lt.s32.totalorder %s25, 1
        %s204 = scalar_select %p203, %s25, 1
        %p205 = scmp.lt.s32.totalorder %s202, 15
        %s206 = scalar_select %p205, %s202, 15
        %s207 = smul.addr %s204, 16
        %s208 = sadd.s32 %s206, %s207
        %s209 = smul.addr %s208, 8
        %s210 = scalar_lea.vmem %s0, %s209
        %s211 = smul.u32 16, %s26
        %v212 = vld [vmem:[%s210] sm:$0xff]
        %v213 = vld [vmem:[%s210 + $0x8] sm:$0xff]
        %v214 = vld [vmem:[%s210 + $0x10] sm:$0xff]
        %v215 = vld [vmem:[%s210 + $0x18] sm:$0xff]
        %v216 = vld [vmem:[%s210 + $0x20] sm:$0xff]
        %v217 = vld [vmem:[%s210 + $0x28] sm:$0xff]
        %v218 = vld [vmem:[%s210 + $0x30] sm:$0xff]
        %v219 = vld [vmem:[%s210 + $0x38] sm:$0xff]
        %v220 = vld [vmem:[%s210 + $0x40] sm:$0xff]
        %v221 = vld [vmem:[%s210 + $0x48] sm:$0xff]
        %v222 = vld [vmem:[%s210 + $0x50] sm:$0xff]
        %v223 = vld [vmem:[%s210 + $0x58] sm:$0xff]
        %v224 = vld [vmem:[%s210 + $0x60] sm:$0xff]
        %v225 = vld [vmem:[%s210 + $0x68] sm:$0xff]
        %v226 = vld [vmem:[%s210 + $0x70] sm:$0xff]
        %v227 = vld [vmem:[%s210 + $0x78] sm:$0xff]
        %v228 = vld [vmem:[%s1] sm:$0xff]
        %v229 = vld [vmem:[%s1 + $0x8] sm:$0xff]
        %v230 = vld [vmem:[%s1 + $0x10] sm:$0xff]
        %v231 = vld [vmem:[%s1 + $0x18] sm:$0xff]
        %v232 = vld [vmem:[%s1 + $0x20] sm:$0xff]
        %v233 = vld [vmem:[%s1 + $0x28] sm:$0xff]
        %v234 = vld [vmem:[%s1 + $0x30] sm:$0xff]
        %v235 = vld [vmem:[%s1 + $0x38] sm:$0xff]
        %v236 = vld [vmem:[%s1 + $0x40] sm:$0xff]
        %v237 = vld [vmem:[%s1 + $0x48] sm:$0xff]
        %vm238 = vcmask 523264
        %v240 = vsel %vm238, %v228, 0
        %v243 = vsel %vm238, %v229, 0
        %v246 = vsel %vm238, %v230, 0
        %v249 = vsel %vm238, %v231, 0
        %v252 = vsel %vm238, %v232, 0
        %v255 = vsel %vm238, %v233, 0
        %v258 = vsel %vm238, %v234, 0
        %v261 = vsel %vm238, %v235, 0
        %v264 = vsel %vm238, %v236, 0
        %v267 = vsel %vm238, %v237, 0
        %v270 = vsel %vm238, %v212, 0
        %v273 = vsel %vm238, %v213, 0
        %v276 = vsel %vm238, %v214, 0
        %v279 = vsel %vm238, %v215, 0
        %v282 = vsel %vm238, %v216, 0
        %v285 = vsel %vm238, %v217, 0
        %v288 = vsel %vm238, %v218, 0
        %v291 = vsel %vm238, %v219, 0
        %v294 = vsel %vm238, %v220, 0
        %v297 = vsel %vm238, %v221, 0
        %v300 = vsel %vm238, %v222, 0
        %v303 = vsel %vm238, %v223, 0
        %v306 = vsel %vm238, %v224, 0
        %v309 = vsel %vm238, %v225, 0
        %v312 = vsel %vm238, %v226, 0
        %v315 = vsel %vm238, %v227, 0
        %317 = vmatpush.xpose.msra.mxu0 %v315
        %318 = vmatpush.xpose.msra.mxu0 %v312
        %319 = vmatpush.xpose.msra.mxu0 %v309
        %320 = vmatpush.xpose.msra.mxu0 %v306
        %321 = vmatpush.xpose.msra.mxu0 %v303
        %322 = vmatpush.xpose.msra.mxu0 %v300
        %323 = vmatpush.xpose.msra.mxu0 %v297
        %324 = vmatpush.xpose.msra.mxu0 %v294
        %325 = vmatpush.xpose.msra.mxu0 %v291
        %326 = vmatpush.xpose.msra.mxu0 %v288
        %327 = vmatpush.xpose.msra.mxu0 %v285
        %328 = vmatpush.xpose.msra.mxu0 %v282
        %329 = vmatpush.xpose.msra.mxu0 %v279
        %330 = vmatpush.xpose.msra.mxu0 %v276
        %331 = vmatpush.xpose.msra.mxu0 %v273
        %332 = vmatpush.xpose.msra.mxu0 %v270
        %333 = vmatmul.f32.gmra.mxu0 %v240
        %v334 = vpop.f32.mrf.mxu0
        %v335 = vadd.f32 0.0, %v334
        %336 = vmatmul.f32.gmra.mxu0 %v243
        %v337 = vpop.f32.mrf.mxu0
        %v338 = vadd.f32 0.0, %v337
        %339 = vmatmul.f32.gmra.mxu0 %v246
        %v340 = vpop.f32.mrf.mxu0
        %v341 = vadd.f32 0.0, %v340
        %342 = vmatmul.f32.gmra.mxu0 %v249
        %v343 = vpop.f32.mrf.mxu0
        %v344 = vadd.f32 0.0, %v343
        %345 = vmatmul.f32.gmra.mxu0 %v252
        %v346 = vpop.f32.mrf.mxu0
        %v347 = vadd.f32 0.0, %v346
        %348 = vmatmul.f32.gmra.mxu0 %v255
        %v349 = vpop.f32.mrf.mxu0
        %v350 = vadd.f32 0.0, %v349
        %351 = vmatmul.f32.gmra.mxu0 %v258
        %v352 = vpop.f32.mrf.mxu0
        %v353 = vadd.f32 0.0, %v352
        %354 = vmatmul.f32.gmra.mxu0 %v261
        %v355 = vpop.f32.mrf.mxu0
        %v356 = vadd.f32 0.0, %v355
        %357 = vmatmul.f32.gmra.mxu0 %v264
        %v358 = vpop.f32.mrf.mxu0
        %v359 = vadd.f32 0.0, %v358
        %360 = vmatmul.f32.gmra.mxu0 %v267
        %v361 = vpop.f32.mrf.mxu0
        %v362 = vadd.f32 0.0, %v361
        %363 = vdwg.mxu0
        %v364 = vmul.f32 %v335, %v335
        %v365 = vmul.f32 %v338, %v338
        %v366 = vmul.f32 %v341, %v341
        %v367 = vmul.f32 %v344, %v344
        %v368 = vmul.f32 %v347, %v347
        %v369 = vmul.f32 %v350, %v350
        %v370 = vmul.f32 %v353, %v353
        %v371 = vmul.f32 %v356, %v356
        %v372 = vmul.f32 %v359, %v359
        %v373 = vmul.f32 %v362, %v362
        %v374 = vadd.f32 %v364, %v369
        %v375 = vadd.f32 %v365, %v370
        %v376 = vadd.f32 %v366, %v371
        %v377 = vadd.f32 %v367, %v372
        %v378 = vadd.f32 %v368, %v373
        %v379 = vrsqrt.pop %v374
        %v380 = vmul.f32 %v379, %v374
        %v381 = vmul.f32 %v380, %v379
        %v382 = vmul.f32 0.5, %v381
        %v383 = vsub.f32 1.5, %v382
        %v384 = vmul.f32 %v379, %v383
        %v385 = vmul.f32 %v374, %v384
        %vm386 = vcmp.eq.f32.partialorder %v374, inf
        %v387 = vsel %vm386, %v374, %v385
        %vm388 = vcmp.eq.f32.partialorder %v374, 0.0
        %v389 = vand.u32 %v374, 2147483648
        %v390 = vsel %vm388, %v389, %v387
        %v391 = vrsqrt.pop %v375
        %v392 = vmul.f32 %v391, %v375
        %v393 = vmul.f32 %v392, %v391
        %v394 = vmul.f32 0.5, %v393
        %v395 = vsub.f32 1.5, %v394
        %v396 = vmul.f32 %v391, %v395
        %v397 = vmul.f32 %v375, %v396
        %vm398 = vcmp.eq.f32.partialorder %v375, inf
        %v399 = vsel %vm398, %v375, %v397
        %vm400 = vcmp.eq.f32.partialorder %v375, 0.0
        %v401 = vand.u32 %v375, 2147483648
        %v402 = vsel %vm400, %v401, %v399
        %v403 = vrsqrt.pop %v376
        %v404 = vmul.f32 %v403, %v376
        %v405 = vmul.f32 %v404, %v403
        %v406 = vmul.f32 0.5, %v405
        %v407 = vsub.f32 1.5, %v406
        %v408 = vmul.f32 %v403, %v407
        %v409 = vmul.f32 %v376, %v408
        %vm410 = vcmp.eq.f32.partialorder %v376, inf
        %v411 = vsel %vm410, %v376, %v409
        %vm412 = vcmp.eq.f32.partialorder %v376, 0.0
        %v413 = vand.u32 %v376, 2147483648
        %v414 = vsel %vm412, %v413, %v411
        %v415 = vrsqrt.pop %v377
        %v416 = vmul.f32 %v415, %v377
        %v417 = vmul.f32 %v416, %v415
        %v418 = vmul.f32 0.5, %v417
        %v419 = vsub.f32 1.5, %v418
        %v420 = vmul.f32 %v415, %v419
        %v421 = vmul.f32 %v377, %v420
        %vm422 = vcmp.eq.f32.partialorder %v377, inf
        %v423 = vsel %vm422, %v377, %v421
        %vm424 = vcmp.eq.f32.partialorder %v377, 0.0
        %v425 = vand.u32 %v377, 2147483648
        %v426 = vsel %vm424, %v425, %v423
        %v427 = vrsqrt.pop %v378
        %v428 = vmul.f32 %v427, %v378
        %v429 = vmul.f32 %v428, %v427
        %v430 = vmul.f32 0.5, %v429
        %v431 = vsub.f32 1.5, %v430
        %v432 = vmul.f32 %v427, %v431
        %v433 = vmul.f32 %v378, %v432
        %vm434 = vcmp.eq.f32.partialorder %v378, inf
        %v435 = vsel %vm434, %v378, %v433
        %vm436 = vcmp.eq.f32.partialorder %v378, 0.0
        %v437 = vand.u32 %v378, 2147483648
        %v438 = vsel %vm436, %v437, %v435
        %439 = vst [vmem:[%s194] sm:$0xff] %v390
        %440 = vst [vmem:[%s194 + $0x8] sm:$0xff] %v402
        %441 = vst [vmem:[%s194 + $0x10] sm:$0xff] %v414
        %442 = vst [vmem:[%s194 + $0x18] sm:$0xff] %v426
        %443 = vst [vmem:[%s194 + $0x20] sm:$0xff] %v438
        %v444 = vand.u32 2147483647, %v350
        %v445 = vand.u32 2147483647, %v353
        %v446 = vand.u32 2147483647, %v356
        %v447 = vand.u32 2147483647, %v359
        %v448 = vand.u32 2147483647, %v362
        %v449 = vand.u32 2147483647, %v335
        %v450 = vand.u32 2147483647, %v338
        %v451 = vand.u32 2147483647, %v341
        %v452 = vand.u32 2147483647, %v344
        %v453 = vand.u32 2147483647, %v347
        %v454 = vmax.f32 %v449, %v444
        %v455 = vmax.f32 %v450, %v445
        %v456 = vmax.f32 %v451, %v446
        %v457 = vmax.f32 %v452, %v447
        %v458 = vmax.f32 %v453, %v448
        %v459 = vmin.f32 %v449, %v444
        %v460 = vmin.f32 %v450, %v445
        %v461 = vmin.f32 %v451, %v446
        %v462 = vmin.f32 %v452, %v447
        %v463 = vmin.f32 %v453, %v448
        %v464 = vmax.f32 %v454, 1e-30
        %v465 = vmax.f32 %v455, 1e-30
        %v466 = vmax.f32 %v456, 1e-30
        %v467 = vmax.f32 %v457, 1e-30
        %v468 = vmax.f32 %v458, 1e-30
        %v469 = vrcp.pop %v464
        %v470 = vmul.f32 %v464, %v469
        %v471 = vsub.f32 1.0, %v470
        %v472 = vmul.f32 %v469, %v471
        %v473 = vadd.f32 %v469, %v472
        %vm474 = vweird.f32 %v464
        %vm475 = vweird.f32 %v469
        %vm476 = vmor %vm474, %vm475
        %v477 = vsel %vm476, %v469, %v473
        %v478 = vand.u32 2147483647, %v464
        %vm479 = vcmp.eq.f32.partialorder %v478, 8.507059e+37
        %v480 = vand.u32 %v464, 2147483648
        %v481 = vor.u32 1.1754944e-38, %v480
        %v482 = vsel %vm479, %v481, %v477
        %v483 = vmul.f32 %v459, %v482
        %v484 = vrcp.pop %v465
        %v485 = vmul.f32 %v465, %v484
        %v486 = vsub.f32 1.0, %v485
        %v487 = vmul.f32 %v484, %v486
        %v488 = vadd.f32 %v484, %v487
        %vm489 = vweird.f32 %v465
        %vm490 = vweird.f32 %v484
        %vm491 = vmor %vm489, %vm490
        %v492 = vsel %vm491, %v484, %v488
        %v493 = vand.u32 2147483647, %v465
        %vm494 = vcmp.eq.f32.partialorder %v493, 8.507059e+37
        %v495 = vand.u32 %v465, 2147483648
        %v496 = vor.u32 1.1754944e-38, %v495
        %v497 = vsel %vm494, %v496, %v492
        %v498 = vmul.f32 %v460, %v497
        %v499 = vrcp.pop %v466
        %v500 = vmul.f32 %v466, %v499
        %v501 = vsub.f32 1.0, %v500
        %v502 = vmul.f32 %v499, %v501
        %v503 = vadd.f32 %v499, %v502
        %vm504 = vweird.f32 %v466
        %vm505 = vweird.f32 %v499
        %vm506 = vmor %vm504, %vm505
        %v507 = vsel %vm506, %v499, %v503
        %v508 = vand.u32 2147483647, %v466
        %vm509 = vcmp.eq.f32.partialorder %v508, 8.507059e+37
        %v510 = vand.u32 %v466, 2147483648
        %v511 = vor.u32 1.1754944e-38, %v510
        %v512 = vsel %vm509, %v511, %v507
        %v513 = vmul.f32 %v461, %v512
        %v514 = vrcp.pop %v467
        %v515 = vmul.f32 %v467, %v514
        %v516 = vsub.f32 1.0, %v515
        %v517 = vmul.f32 %v514, %v516
        %v518 = vadd.f32 %v514, %v517
        %vm519 = vweird.f32 %v467
        %vm520 = vweird.f32 %v514
        %vm521 = vmor %vm519, %vm520
        %v522 = vsel %vm521, %v514, %v518
        %v523 = vand.u32 2147483647, %v467
        %vm524 = vcmp.eq.f32.partialorder %v523, 8.507059e+37
        %v525 = vand.u32 %v467, 2147483648
        %v526 = vor.u32 1.1754944e-38, %v525
        %v527 = vsel %vm524, %v526, %v522
        %v528 = vmul.f32 %v462, %v527
        %v529 = vrcp.pop %v468
        %v530 = vmul.f32 %v468, %v529
        %v531 = vsub.f32 1.0, %v530
        %v532 = vmul.f32 %v529, %v531
        %v533 = vadd.f32 %v529, %v532
        %vm534 = vweird.f32 %v468
        %vm535 = vweird.f32 %v529
        %vm536 = vmor %vm534, %vm535
        %v537 = vsel %vm536, %v529, %v533
        %v538 = vand.u32 2147483647, %v468
        %vm539 = vcmp.eq.f32.partialorder %v538, 8.507059e+37
        %v540 = vand.u32 %v468, 2147483648
        %v541 = vor.u32 1.1754944e-38, %v540
        %v542 = vsel %vm539, %v541, %v537
        %v543 = vmul.f32 %v463, %v542
        %vm544 = vcmp.gt.f32.partialorder %v483, 0.41421357
        %vm545 = vcmp.gt.f32.partialorder %v498, 0.41421357
        %vm546 = vcmp.gt.f32.partialorder %v513, 0.41421357
        %vm547 = vcmp.gt.f32.partialorder %v528, 0.41421357
        %vm548 = vcmp.gt.f32.partialorder %v543, 0.41421357
        %v549 = vsub.f32 %v483, 1.0
        %v550 = vsub.f32 %v498, 1.0
        %v551 = vsub.f32 %v513, 1.0
        %v552 = vsub.f32 %v528, 1.0
        %v553 = vsub.f32 %v543, 1.0
        %v554 = vadd.f32 %v483, 1.0
        %v555 = vadd.f32 %v498, 1.0
        %v556 = vadd.f32 %v513, 1.0
        %v557 = vadd.f32 %v528, 1.0
        %v558 = vadd.f32 %v543, 1.0
        %v559 = vrcp.pop %v554
        %v560 = vmul.f32 %v554, %v559
        %v561 = vsub.f32 1.0, %v560
        %v562 = vmul.f32 %v559, %v561
        %v563 = vadd.f32 %v559, %v562
        %vm564 = vweird.f32 %v554
        %vm565 = vweird.f32 %v559
        %vm566 = vmor %vm564, %vm565
        %v567 = vsel %vm566, %v559, %v563
        %v568 = vand.u32 2147483647, %v554
        %vm569 = vcmp.eq.f32.partialorder %v568, 8.507059e+37
        %v570 = vand.u32 %v554, 2147483648
        %v571 = vor.u32 1.1754944e-38, %v570
        %v572 = vsel %vm569, %v571, %v567
        %v573 = vmul.f32 %v549, %v572
        %v574 = vrcp.pop %v555
        %v575 = vmul.f32 %v555, %v574
        %v576 = vsub.f32 1.0, %v575
        %v577 = vmul.f32 %v574, %v576
        %v578 = vadd.f32 %v574, %v577
        %vm579 = vweird.f32 %v555
        %vm580 = vweird.f32 %v574
        %vm581 = vmor %vm579, %vm580
        %v582 = vsel %vm581, %v574, %v578
        %v583 = vand.u32 2147483647, %v555
        %vm584 = vcmp.eq.f32.partialorder %v583, 8.507059e+37
        %v585 = vand.u32 %v555, 2147483648
        %v586 = vor.u32 1.1754944e-38, %v585
        %v587 = vsel %vm584, %v586, %v582
        %v588 = vmul.f32 %v550, %v587
        %v589 = vrcp.pop %v556
        %v590 = vmul.f32 %v556, %v589
        %v591 = vsub.f32 1.0, %v590
        %v592 = vmul.f32 %v589, %v591
        %v593 = vadd.f32 %v589, %v592
        %vm594 = vweird.f32 %v556
        %vm595 = vweird.f32 %v589
        %vm596 = vmor %vm594, %vm595
        %v597 = vsel %vm596, %v589, %v593
        %v598 = vand.u32 2147483647, %v556
        %vm599 = vcmp.eq.f32.partialorder %v598, 8.507059e+37
        %v600 = vand.u32 %v556, 2147483648
        %v601 = vor.u32 1.1754944e-38, %v600
        %v602 = vsel %vm599, %v601, %v597
        %v603 = vmul.f32 %v551, %v602
        %v604 = vrcp.pop %v557
        %v605 = vmul.f32 %v557, %v604
        %v606 = vsub.f32 1.0, %v605
        %v607 = vmul.f32 %v604, %v606
        %v608 = vadd.f32 %v604, %v607
        %vm609 = vweird.f32 %v557
        %vm610 = vweird.f32 %v604
        %vm611 = vmor %vm609, %vm610
        %v612 = vsel %vm611, %v604, %v608
        %v613 = vand.u32 2147483647, %v557
        %vm614 = vcmp.eq.f32.partialorder %v613, 8.507059e+37
        %v615 = vand.u32 %v557, 2147483648
        %v616 = vor.u32 1.1754944e-38, %v615
        %v617 = vsel %vm614, %v616, %v612
        %v618 = vmul.f32 %v552, %v617
        %v619 = vrcp.pop %v558
        %v620 = vmul.f32 %v558, %v619
        %v621 = vsub.f32 1.0, %v620
        %v622 = vmul.f32 %v619, %v621
        %v623 = vadd.f32 %v619, %v622
        %vm624 = vweird.f32 %v558
        %vm625 = vweird.f32 %v619
        %vm626 = vmor %vm624, %vm625
        %v627 = vsel %vm626, %v619, %v623
        %v628 = vand.u32 2147483647, %v558
        %vm629 = vcmp.eq.f32.partialorder %v628, 8.507059e+37
        %v630 = vand.u32 %v558, 2147483648
        %v631 = vor.u32 1.1754944e-38, %v630
        %v632 = vsel %vm629, %v631, %v627
        %v633 = vmul.f32 %v553, %v632
        %v634 = vsel %vm544, %v573, %v483
        %v635 = vsel %vm545, %v588, %v498
        %v636 = vsel %vm546, %v603, %v513
        %v637 = vsel %vm547, %v618, %v528
        %v638 = vsel %vm548, %v633, %v543
        %v639 = vsel %vm544, 0.7853982, 0.0
        %v640 = vsel %vm545, 0.7853982, 0.0
        %v641 = vsel %vm546, 0.7853982, 0.0
        %v642 = vsel %vm547, 0.7853982, 0.0
        %v643 = vsel %vm548, 0.7853982, 0.0
        %v644 = vmul.f32 %v634, %v634
        %v645 = vmul.f32 %v635, %v635
        %v646 = vmul.f32 %v636, %v636
        %v647 = vmul.f32 %v637, %v637
        %v648 = vmul.f32 %v638, %v638
        %v649 = vmul.f32 %v644, 0.080537446
        %v650 = vmul.f32 %v645, 0.080537446
        %v651 = vmul.f32 %v646, 0.080537446
        %v652 = vmul.f32 %v647, 0.080537446
        %v653 = vmul.f32 %v648, 0.080537446
        %v654 = vsub.f32 %v649, 0.13877685
        %v655 = vsub.f32 %v650, 0.13877685
        %v656 = vsub.f32 %v651, 0.13877685
        %v657 = vsub.f32 %v652, 0.13877685
        %v658 = vsub.f32 %v653, 0.13877685
        %v659 = vmul.f32 %v654, %v644
        %v660 = vmul.f32 %v655, %v645
        %v661 = vmul.f32 %v656, %v646
        %v662 = vmul.f32 %v657, %v647
        %v663 = vmul.f32 %v658, %v648
        %v664 = vadd.f32 %v659, 0.19977711
        %v665 = vadd.f32 %v660, 0.19977711
        %v666 = vadd.f32 %v661, 0.19977711
        %v667 = vadd.f32 %v662, 0.19977711
        %v668 = vadd.f32 %v663, 0.19977711
        %v669 = vmul.f32 %v664, %v644
        %v670 = vmul.f32 %v665, %v645
        %v671 = vmul.f32 %v666, %v646
        %v672 = vmul.f32 %v667, %v647
        %v673 = vmul.f32 %v668, %v648
        %v674 = vsub.f32 %v669, 0.3333295
        %v675 = vsub.f32 %v670, 0.3333295
        %v676 = vsub.f32 %v671, 0.3333295
        %v677 = vsub.f32 %v672, 0.3333295
        %v678 = vsub.f32 %v673, 0.3333295
        %v679 = vadd.f32 %v639, %v634
        %v680 = vadd.f32 %v640, %v635
        %v681 = vadd.f32 %v641, %v636
        %v682 = vadd.f32 %v642, %v637
        %v683 = vadd.f32 %v643, %v638
        %v684 = vmul.f32 %v634, %v644
        %v685 = vmul.f32 %v635, %v645
        %v686 = vmul.f32 %v636, %v646
        %v687 = vmul.f32 %v637, %v647
        %v688 = vmul.f32 %v638, %v648
        %v689 = vmul.f32 %v684, %v674
        %v690 = vmul.f32 %v685, %v675
        %v691 = vmul.f32 %v686, %v676
        %v692 = vmul.f32 %v687, %v677
        %v693 = vmul.f32 %v688, %v678
        %v694 = vadd.f32 %v679, %v689
        %v695 = vadd.f32 %v680, %v690
        %v696 = vadd.f32 %v681, %v691
        %v697 = vadd.f32 %v682, %v692
        %v698 = vadd.f32 %v683, %v693
        %vm699 = vcmp.gt.f32.partialorder %v444, %v449
        %vm700 = vcmp.gt.f32.partialorder %v445, %v450
        %vm701 = vcmp.gt.f32.partialorder %v446, %v451
        %vm702 = vcmp.gt.f32.partialorder %v447, %v452
        %vm703 = vcmp.gt.f32.partialorder %v448, %v453
        %v704 = vsub.f32 1.5707964, %v694
        %v705 = vsub.f32 1.5707964, %v695
        %v706 = vsub.f32 1.5707964, %v696
        %v707 = vsub.f32 1.5707964, %v697
        %v708 = vsub.f32 1.5707964, %v698
        %v709 = vsel %vm699, %v704, %v694
        %v710 = vsel %vm700, %v705, %v695
        %v711 = vsel %vm701, %v706, %v696
        %v712 = vsel %vm702, %v707, %v697
        %v713 = vsel %vm703, %v708, %v698
        %vm714 = vcmp.lt.f32.partialorder %v335, 0.0
        %vm715 = vcmp.lt.f32.partialorder %v338, 0.0
        %vm716 = vcmp.lt.f32.partialorder %v341, 0.0
        %vm717 = vcmp.lt.f32.partialorder %v344, 0.0
        %vm718 = vcmp.lt.f32.partialorder %v347, 0.0
        %v719 = vsub.f32 3.1415927, %v709
        %v720 = vsub.f32 3.1415927, %v710
        %v721 = vsub.f32 3.1415927, %v711
        %v722 = vsub.f32 3.1415927, %v712
        %v723 = vsub.f32 3.1415927, %v713
        %v724 = vsel %vm714, %v719, %v709
        %v725 = vsel %vm715, %v720, %v710
        %v726 = vsel %vm716, %v721, %v711
        %v727 = vsel %vm717, %v722, %v712
        %v728 = vsel %vm718, %v723, %v713
        %vm729 = vcmp.lt.f32.partialorder %v350, 0.0
        %vm730 = vcmp.lt.f32.partialorder %v353, 0.0
        %vm731 = vcmp.lt.f32.partialorder %v356, 0.0
        %vm732 = vcmp.lt.f32.partialorder %v359, 0.0
        %vm733 = vcmp.lt.f32.partialorder %v362, 0.0
        %v734 = vsub.f32 0.0, %v724
        %v735 = vsub.f32 0.0, %v725
        %v736 = vsub.f32 0.0, %v726
        %v737 = vsub.f32 0.0, %v727
        %v738 = vsub.f32 0.0, %v728
        %v739 = vsel %vm729, %v734, %v724
        %v740 = vsel %vm730, %v735, %v725
        %v741 = vsel %vm731, %v736, %v726
        %v742 = vsel %vm732, %v737, %v727
        %v743 = vsel %vm733, %v738, %v728
        %744 = vst [vmem:[%s201] sm:$0xff] %v739
        %745 = vst [vmem:[%s201 + $0x8] sm:$0xff] %v740
        %746 = vst [vmem:[%s201 + $0x10] sm:$0xff] %v741
        %747 = vst [vmem:[%s201 + $0x18] sm:$0xff] %v742
        %748 = vst [vmem:[%s201 + $0x20] sm:$0xff] %v743
        %s749 = sand.u32 %s92, 1
        %s750 = scalar_lea.sflag [#allocation3], %s749
        %s751 = sand.u32 %s92, 1
        %s752 = smul.addr %s751, 40
        %s753 = scalar_lea.vmem [#allocation2], %s752
        %s754 = sand.u32 %s120, 1
        %s755 = scalar_lea.sflag [#allocation5], %s754
        %s756 = sand.u32 %s120, 1
        %s757 = smul.addr %s756, 40
        %s758 = scalar_lea.vmem [#allocation4], %s757
        // Predicated region
        $region29: #{tpu_custom_call.1} parent=27 // pred_check
          %p759 = pneg %p102
        $region30: #{tpu_custom_call.1} parent=27 // pred_check_branch
          %761 = sbr.rel (%p759) target = $region32
        $region31: #{tpu_custom_call.1} parent=27 // pred_region
          %763 = vsyncadd %s750, 0
          %s764 = smul.addr %s25, 5
          %s765 = sadd.s32 %s26, %s764
          %s766 = smul.addr %s765, 8
          %s767 = scalar_lea.hbm %s2, %s766
          %s768 = sshll.u32 %s753, 4
          %s769 = int_to_ptr.vmem [resolvable:$true] %s768
          %s770 = sshll.u32 %s767, 4
          %s771 = int_to_ptr.hbm [resolvable:$true] %s770
          %776 = dma.vmem_to_hbm [thread:$0]  %s769, 640, %s771, %s750, 128, 128, 8
        $region32: #{tpu_custom_call.1} parent=27 // pred_fallthru
          _
        // Predicated region
        $region33: #{tpu_custom_call.1} parent=27 // pred_check
          %p777 = pneg %p130
        $region34: #{tpu_custom_call.1} parent=27 // pred_check_branch
          %779 = sbr.rel (%p777) target = $region36
        $region35: #{tpu_custom_call.1} parent=27 // pred_region
          %781 = vsyncadd %s755, 0
          %s782 = smul.addr %s25, 5
          %s783 = sadd.s32 %s26, %s782
          %s784 = smul.addr %s783, 8
          %s785 = scalar_lea.hbm %s3, %s784
          %s786 = sshll.u32 %s758, 4
          %s787 = int_to_ptr.vmem [resolvable:$true] %s786
          %s788 = sshll.u32 %s785, 4
          %s789 = int_to_ptr.hbm [resolvable:$true] %s788
          %794 = dma.vmem_to_hbm [thread:$0]  %s787, 640, %s789, %s755, 128, 128, 8
        $region36: #{tpu_custom_call.1} parent=27 // pred_fallthru
          _
      $region28: #{tpu_custom_call.1} parent=5 // pred_fallthru
        _
      %p795 = scmp.le.s32.totalorder 2, %s16
      // Predicated region
      $region37: #{tpu_custom_call.1} parent=5 // pred_check
        %p796 = pneg %p795
      $region38: #{tpu_custom_call.1} parent=5 // pred_check_branch
        %798 = sbr.rel (%p796) target = $region40
      $region39: #{tpu_custom_call.1} parent=5 // pred_region
        %s799 = ssub.s32 %s16, 2
        // Predicated region
        $region41: #{tpu_custom_call.1} parent=39 // pred_check
          %p800 = pneg %p108
        $region42: #{tpu_custom_call.1} parent=39 // pred_check_branch
          %802 = sbr.rel (%p800) target = $region44
        $region43: #{tpu_custom_call.1} parent=39 // pred_region
          %s803 = sand.u32 %s93, 1
          %s804 = scalar_lea.sflag [#allocation3], %s803
          %s805 = sand.u32 %s93, 1
          %s806 = smul.addr %s805, 40
          %s807 = scalar_lea.vmem [#allocation2], %s806
          %809 = dma.done %s804, 640
        $region44: #{tpu_custom_call.1} parent=39 // pred_fallthru
          _
        // Predicated region
        $region45: #{tpu_custom_call.1} parent=39 // pred_check
          %p810 = pneg %p136
        $region46: #{tpu_custom_call.1} parent=39 // pred_check_branch
          %812 = sbr.rel (%p810) target = $region48
        $region47: #{tpu_custom_call.1} parent=39 // pred_region
          %s813 = sand.u32 %s121, 1
          %s814 = scalar_lea.sflag [#allocation5], %s813
          %s815 = sand.u32 %s121, 1
          %s816 = smul.addr %s815, 40
          %s817 = scalar_lea.vmem [#allocation4], %s816
          %819 = dma.done %s814, 640
        $region48: #{tpu_custom_call.1} parent=39 // pred_fallthru
          _
      $region40: #{tpu_custom_call.1} parent=5 // pred_fallthru
        _
    $region6: #{tpu_custom_call.1} parent=1 // loop_footer
      %s20 = sadd.s32 1, %s16
    $region7: #{tpu_custom_call.1} parent=1 // loop_footer_branch
      %15 = sbr.rel target = $region3
    $region8: #{tpu_custom_call.1} parent=1 // loop_exit
      _
    %820 = vsyncpa [#allocation3], 1
    %s821 = scalar_lea.sflag [#allocation3], 1
    %822 = vsyncpa %s821, 1
    %823 = vsyncpa [#allocation5], 1
    %s824 = scalar_lea.sflag [#allocation5], 1
    %825 = vsyncpa %s824, 1

</llo_original>
